<compile_context>
chip_gen: v5e
topology: v5e:2x2
jax: 0.10.0
libtpu: 0.0.40
codegen_flags: <defaults>
</compile_context>

<pallas_src>
import math
import jax
import jax.numpy as jnp
from jax.experimental import pallas as pl
from jax.experimental.pallas import tpu as pltpu

NEG_SLOPE = 0.01  # nn.LeakyReLU default negative_slope


def _round_up(x, m):
    return (x + m - 1) // m * m


def _leaky_relu(x):
    # For 0 < slope < 1: max(x, slope*x) == LeakyReLU(x).  One mul + one max.
    return jnp.maximum(x, NEG_SLOPE * x)


def _mlp_kernel(x_ref, w1_ref, b1_ref, w2_ref, b2_ref, w3_ref, b3_ref, o_ref):
    # bf16 operands on the MXU, f32 accumulation, f32 bias add / activation.
    h1 = jnp.dot(x_ref[...], w1_ref[...],
                 preferred_element_type=jnp.float32) + b1_ref[...]
    h1 = _leaky_relu(h1).astype(jnp.bfloat16)

    h2 = jnp.dot(h1, w2_ref[...],
                 preferred_element_type=jnp.float32) + b2_ref[...]
    h2 = _leaky_relu(h2).astype(jnp.bfloat16)

    h3 = jnp.dot(h2, w3_ref[...],
                 preferred_element_type=jnp.float32) + b3_ref[...]
    h3 = _leaky_relu(h3)

    o_ref[...] = h3.astype(o_ref.dtype)


def linear_encoder_forward(x, params, *, batch_tile=1024):
    """x: (B, in_dim) float32.  params: dict with w1,b1,w2,b2,w3,b3 (f32)."""
    B, in_dim = x.shape
    w1, b1 = params["w1"], params["b1"]
    w2, b2 = params["w2"], params["b2"]
    w3, b3 = params["w3"], params["b3"]
    d1 = w1.shape[1]
    d2 = w2.shape[1]
    d3 = w3.shape[1]

    # --- pad layer-1 K dim to a lane-friendly 128 (zeros -> identical result)
    in_p = _round_up(in_dim, 128)
    if in_p != in_dim:
        x = jnp.pad(x, ((0, 0), (0, in_p - in_dim)))
        w1 = jnp.pad(w1, ((0, in_p - in_dim), (0, 0)))

    # --- bf16 operands for MXU throughput / halved HBM read traffic
    xb = x.astype(jnp.bfloat16)
    w1b, w2b, w3b = (w.astype(jnp.bfloat16) for w in (w1, w2, w3))
    b1f, b2f, b3f = (b.astype(jnp.float32) for b in (b1, b2, b3))

    # --- batch tiling: multiple of 8, at most `batch_tile`; pad B up to a
    #     whole number of tiles instead of asserting divisibility.
    tile = min(batch_tile, _round_up(B, 8))
    tile = _round_up(tile, 8)
    Bp = _round_up(B, tile)
    if Bp != B:
        xb = jnp.pad(xb, ((0, Bp - B), (0, 0)))
    grid = (Bp // tile,)

    # Constant index_map -> weight/bias blocks stay resident in VMEM.
    full = lambda arr: pl.BlockSpec(arr.shape, lambda i: (0, 0))

    flops = 2 * Bp * (in_p * d1 + d1 * d2 + d2 * d3)
    bytes_accessed = (
        xb.size * 2 + Bp * d3 * 4
        + (w1b.size + w2b.size + w3b.size) * 2
        + (b1f.size + b2f.size + b3f.size) * 4
    )

    out = pl.pallas_call(
        _mlp_kernel,
        out_shape=jax.ShapeDtypeStruct((Bp, d3), jnp.float32),
        grid_spec=pltpu.PrefetchScalarGridSpec(
            num_scalar_prefetch=0,
            grid=grid,
            in_specs=[
                pl.BlockSpec((tile, in_p), lambda i: (i, 0)),
                full(w1b), full(b1f),
                full(w2b), full(b2f),
                full(w3b), full(b3f),
            ],
            out_specs=pl.BlockSpec((tile, d3), lambda i: (i, 0)),
        ),
        compiler_params=pltpu.CompilerParams(
            dimension_semantics=("parallel",),
            vmem_limit_bytes=32 * 1024 * 1024,
        ),
        cost_estimate=pl.CostEstimate(
            flops=flops, transcendentals=0, bytes_accessed=bytes_accessed),
    )(xb, w1b, b1f, w2b, b2f, w3b, b3f)

    if Bp != B:
        out = out[:B]
    return out


def init_params(key, in_dim):
    """Deterministic PyTorch-style (kaiming-uniform-ish) init, stored as (in, out)."""
    dims = [(in_dim, 128), (128, 128), (128, 256)]
    params = {}
    for idx, (fan_in, fan_out) in enumerate(dims, start=1):
        key, kw, kb = jax.random.split(key, 3)
        bound = 1.0 / math.sqrt(fan_in)
        params[f"w{idx}"] = jax.random.uniform(
            kw, (fan_in, fan_out), jnp.float32, -bound, bound)
        params[f"b{idx}"] = jax.random.uniform(
            kb, (1, fan_out), jnp.float32, -bound, bound)
    return params


def reference_forward(x, params):
    """Pure-JAX reference at the same (bf16 operands, f32 accumulate) precision."""
    h = x.astype(jnp.bfloat16)
    for i in (1, 2, 3):
        w = params[f"w{i}"].astype(jnp.bfloat16)
        b = params[f"b{i}"].astype(jnp.float32)
        h = jnp.dot(h, w, preferred_element_type=jnp.float32) + b
        h = jnp.maximum(h, NEG_SLOPE * h)
        if i < 3:
            h = h.astype(jnp.bfloat16)
    return h.astype(jnp.float32)


if __name__ == "__main__":
    num_agent = 5                       # -> in_dim = 4 * (num_agent - 1) = 16
    in_dim = 4 * (num_agent - 1)
    batch = 8                           # small test batch; tile shrinks to fit

    key = jax.random.PRNGKey(0)
    key, kx = jax.random.split(key)
    x = jax.random.normal(kx, (batch, in_dim), jnp.float32)
    params = init_params(key, in_dim)

    out = linear_encoder_forward(x, params)
    out = jax.block_until_ready(out)

    ref = reference_forward(x, params)
    assert out.shape == (batch, 256), out.shape
    assert jnp.allclose(out, ref, atol=2e-2, rtol=2e-2), "mismatch vs reference"

    print("KERNEL_OK")
</pallas_src>

<mosaic_0001>
module attributes {stable_mosaic.version = 11 : i64} {
  func.func @_mlp_kernel(%arg0: i32, %arg1: memref<8x128xbf16, #tpu.memory_space<vmem>>, %arg2: memref<128x128xbf16, #tpu.memory_space<vmem>>, %arg3: memref<1x128xf32, #tpu.memory_space<vmem>>, %arg4: memref<128x128xbf16, #tpu.memory_space<vmem>>, %arg5: memref<1x128xf32, #tpu.memory_space<vmem>>, %arg6: memref<128x256xbf16, #tpu.memory_space<vmem>>, %arg7: memref<1x256xf32, #tpu.memory_space<vmem>>, %arg8: memref<8x256xf32, #tpu.memory_space<vmem>>) attributes {dimension_semantics = [#tpu.dimension_semantics<parallel>], iteration_bounds = array<i64: 1>, scalar_prefetch = 0 : i64, scratch_operands = 0 : i64, tpu.core_type = #tpu.core_type<tc>, window_params = [{transform_indices = @transform_0, window_bounds = array<i64: 8, 128>}, {pipeline_mode = #tpu.pipeline_mode<synchronous>, transform_indices = @transform_1, window_bounds = array<i64: 128, 128>}, {pipeline_mode = #tpu.pipeline_mode<synchronous>, transform_indices = @transform_2, window_bounds = array<i64: 1, 128>}, {pipeline_mode = #tpu.pipeline_mode<synchronous>, transform_indices = @transform_3, window_bounds = array<i64: 128, 128>}, {pipeline_mode = #tpu.pipeline_mode<synchronous>, transform_indices = @transform_4, window_bounds = array<i64: 1, 128>}, {pipeline_mode = #tpu.pipeline_mode<synchronous>, transform_indices = @transform_5, window_bounds = array<i64: 128, 256>}, {pipeline_mode = #tpu.pipeline_mode<synchronous>, transform_indices = @transform_6, window_bounds = array<i64: 1, 256>}, {transform_indices = @transform_7, window_bounds = array<i64: 8, 256>}]} {
    %c0 = arith.constant 0 : index
    %c0_0 = arith.constant 0 : index
    %0 = vector.load %arg1[%c0, %c0_0] : memref<8x128xbf16, #tpu.memory_space<vmem>>, vector<8x128xbf16>
    %c0_1 = arith.constant 0 : index
    %c0_2 = arith.constant 0 : index
    %1 = vector.load %arg2[%c0_1, %c0_2] : memref<128x128xbf16, #tpu.memory_space<vmem>>, vector<128x128xbf16>
    %cst = arith.constant dense<0.000000e+00> : vector<8x128xf32>
    %2 = tpu.matmul %0, %1, %cst {dimension_numbers = #tpu.dot_dimension_numbers<[1], [0], [0], [1], [0, 0, 1, 1], [], []>} : vector<8x128xbf16>, vector<128x128xbf16>, vector<8x128xf32> -> vector<8x128xf32>
    %c0_3 = arith.constant 0 : index
    %c0_4 = arith.constant 0 : index
    %3 = vector.load %arg3[%c0_3, %c0_4] : memref<1x128xf32, #tpu.memory_space<vmem>>, vector<1x128xf32>
    %4 = vector.broadcast %3 : vector<1x128xf32> to vector<8x128xf32>
    %5 = arith.addf %2, %4 : vector<8x128xf32>
    %cst_5 = arith.constant 0.00999999977 : f32
    %6 = vector.broadcast %cst_5 : f32 to vector<8x128xf32>
    %7 = arith.mulf %6, %5 : vector<8x128xf32>
    %8 = arith.maximumf %5, %7 : vector<8x128xf32>
    %9 = arith.truncf %8 : vector<8x128xf32> to vector<8x128xbf16>
    %c0_6 = arith.constant 0 : index
    %c0_7 = arith.constant 0 : index
    %10 = vector.load %arg4[%c0_6, %c0_7] : memref<128x128xbf16, #tpu.memory_space<vmem>>, vector<128x128xbf16>
    %cst_8 = arith.constant dense<0.000000e+00> : vector<8x128xf32>
    %11 = tpu.matmul %9, %10, %cst_8 {dimension_numbers = #tpu.dot_dimension_numbers<[1], [0], [0], [1], [0, 0, 1, 1], [], []>} : vector<8x128xbf16>, vector<128x128xbf16>, vector<8x128xf32> -> vector<8x128xf32>
    %c0_9 = arith.constant 0 : index
    %c0_10 = arith.constant 0 : index
    %12 = vector.load %arg5[%c0_9, %c0_10] : memref<1x128xf32, #tpu.memory_space<vmem>>, vector<1x128xf32>
    %13 = vector.broadcast %12 : vector<1x128xf32> to vector<8x128xf32>
    %14 = arith.addf %11, %13 : vector<8x128xf32>
    %cst_11 = arith.constant 0.00999999977 : f32
    %15 = vector.broadcast %cst_11 : f32 to vector<8x128xf32>
    %16 = arith.mulf %15, %14 : vector<8x128xf32>
    %17 = arith.maximumf %14, %16 : vector<8x128xf32>
    %18 = arith.truncf %17 : vector<8x128xf32> to vector<8x128xbf16>
    %c0_12 = arith.constant 0 : index
    %c0_13 = arith.constant 0 : index
    %19 = vector.load %arg6[%c0_12, %c0_13] : memref<128x256xbf16, #tpu.memory_space<vmem>>, vector<128x256xbf16>
    %cst_14 = arith.constant dense<0.000000e+00> : vector<8x256xf32>
    %20 = tpu.matmul %18, %19, %cst_14 {dimension_numbers = #tpu.dot_dimension_numbers<[1], [0], [0], [1], [0, 0, 1, 1], [], []>} : vector<8x128xbf16>, vector<128x256xbf16>, vector<8x256xf32> -> vector<8x256xf32>
    %c0_15 = arith.constant 0 : index
    %c0_16 = arith.constant 0 : index
    %21 = vector.load %arg7[%c0_15, %c0_16] : memref<1x256xf32, #tpu.memory_space<vmem>>, vector<1x256xf32>
    %22 = vector.broadcast %21 : vector<1x256xf32> to vector<8x256xf32>
    %23 = arith.addf %20, %22 : vector<8x256xf32>
    %cst_17 = arith.constant 0.00999999977 : f32
    %24 = vector.broadcast %cst_17 : f32 to vector<8x256xf32>
    %25 = arith.mulf %24, %23 : vector<8x256xf32>
    %26 = arith.maximumf %23, %25 : vector<8x256xf32>
    %c0_18 = arith.constant 0 : index
    %c0_19 = arith.constant 0 : index
    %27 = vector.load %arg8[%c0_18, %c0_19] : memref<8x256xf32, #tpu.memory_space<vmem>>, vector<8x256xf32>
    tpu.vector_store %arg8[%c0_18, %c0_19], %26 {strides = array<i32>} : memref<8x256xf32, #tpu.memory_space<vmem>>, vector<8x256xf32>,
    return
  }
  func.func @transform_0(%arg0: i32) -> (i32, i32) {
    %c0_i32 = arith.constant 0 : i32
    %c0_i32_0 = arith.constant 0 : i32
    return %arg0, %c0_i32 : i32, i32
  }
  func.func @transform_1(%arg0: i32) -> (i32, i32) {
    %c0_i32 = arith.constant 0 : i32
    %c0_i32_0 = arith.constant 0 : i32
    %c0_i32_1 = arith.constant 0 : i32
    return %c0_i32, %c0_i32_0 : i32, i32
  }
  func.func @transform_2(%arg0: i32) -> (i32, i32) {
    %c0_i32 = arith.constant 0 : i32
    %c0_i32_0 = arith.constant 0 : i32
    %c0_i32_1 = arith.constant 0 : i32
    return %c0_i32, %c0_i32_0 : i32, i32
  }
  func.func @transform_3(%arg0: i32) -> (i32, i32) {
    %c0_i32 = arith.constant 0 : i32
    %c0_i32_0 = arith.constant 0 : i32
    %c0_i32_1 = arith.constant 0 : i32
    return %c0_i32, %c0_i32_0 : i32, i32
  }
  func.func @transform_4(%arg0: i32) -> (i32, i32) {
    %c0_i32 = arith.constant 0 : i32
    %c0_i32_0 = arith.constant 0 : i32
    %c0_i32_1 = arith.constant 0 : i32
    return %c0_i32, %c0_i32_0 : i32, i32
  }
  func.func @transform_5(%arg0: i32) -> (i32, i32) {
    %c0_i32 = arith.constant 0 : i32
    %c0_i32_0 = arith.constant 0 : i32
    %c0_i32_1 = arith.constant 0 : i32
    return %c0_i32, %c0_i32_0 : i32, i32
  }
  func.func @transform_6(%arg0: i32) -> (i32, i32) {
    %c0_i32 = arith.constant 0 : i32
    %c0_i32_0 = arith.constant 0 : i32
    %c0_i32_1 = arith.constant 0 : i32
    return %c0_i32, %c0_i32_0 : i32, i32
  }
  func.func @transform_7(%arg0: i32) -> (i32, i32) {
    %c0_i32 = arith.constant 0 : i32
    %c0_i32_0 = arith.constant 0 : i32
    return %arg0, %c0_i32 : i32, i32
  }
}

</mosaic_0001>

<llo_original>
// kernel: tpu_custom_call.1
$region0: #{tpu_custom_call.1}
  #allocation0 [shape = 'u32[]', space=smem, size = 0x4, offset = 0x4, fixed_abs, tag = 'smem constant byte address 0x4 - core index']
  #allocation1 [shape = 'u32[72,128]{1,0:T(1,128)}', space=vmem, size = 0x9000, scoped, tag = 'internal scratch']
  %s0 = inlined_call_operand.hbm [shape: bf16[8,128], index: 0, kind: input, shape index: {}]
  %s1 = inlined_call_operand.hbm [shape: bf16[128,128], index: 1, kind: input, shape index: {}]
  %s2 = inlined_call_operand.vmem [shape: f32[1,128], index: 2, kind: input, shape index: {}]
  %s3 = inlined_call_operand.hbm [shape: bf16[128,128], index: 3, kind: input, shape index: {}]
  %s4 = inlined_call_operand.hbm [shape: f32[1,128], index: 4, kind: input, shape index: {}]
  %s5 = inlined_call_operand.hbm [shape: bf16[128,256], index: 5, kind: input, shape index: {}]
  %s6 = inlined_call_operand.vmem [shape: f32[1,256], index: 6, kind: input, shape index: {}]
  %s7 = inlined_call_operand.hbm [shape: f32[8,256], index: 7, kind: output, shape index: {}]
  %s8 = sld [smem:[#allocation0]]
  $region58: #{tpu_custom_call.1} parent=0
    _
  %s10 = ssub.s32 1, %s8
  %s11 = scalar_select 0, %s10, %s8
  $region1: #{tpu_custom_call.1} parent=0
    #allocation2 [shape = 'u8[2048]{0}', space=vmem, size = 0x800, scoped, tag = 'input window, operand 0, single buffered']
    #allocation3 [shape = 's32[1]{0}', space=sflag, size = 0x4, scoped, tag = 'scoped memory for tpu_custom_call.1']
    #allocation4 [shape = 's32[1]{0}', space=sflag, size = 0x4, scoped, tag = 'scoped memory for tpu_custom_call.1']
    #allocation5 [shape = 'u8[32768]{0}', space=vmem, size = 0x8000, scoped, tag = 'input window, operand 1, single buffered']
    #allocation6 [shape = 's32[1]{0}', space=sflag, size = 0x4, scoped, tag = 'scoped memory for tpu_custom_call.1']
    #allocation7 [shape = 'u8[32768]{0}', space=vmem, size = 0x8000, scoped, tag = 'input window, operand 3, single buffered']
    #allocation8 [shape = 'u8[512]{0}', space=vmem, size = 0x400, scoped, tag = 'input window, operand 4, single buffered']
    #allocation9 [shape = 's32[1]{0}', space=sflag, size = 0x4, scoped, tag = 'scoped memory for tpu_custom_call.1']
    #allocation10 [shape = 'u8[65536]{0}', space=vmem, size = 0x10000, scoped, tag = 'input window, operand 5, single buffered']
    #allocation11 [shape = 'u8[8192]{0}', space=vmem, size = 0x2000, scoped, tag = 'output window, operand 0, single buffered']
    %12 = vsyncpa [#allocation3], 0
    %13 = vsyncpa [#allocation6], 0
    %14 = vsyncpa [#allocation9], 0
    %15 = vsyncpa [#allocation4], 0
    // Predicated region
    $region2: #{tpu_custom_call.1} parent=1 // pred_check
      _
    $region3: #{tpu_custom_call.1} parent=1 // pred_check_branch
      %17 = sbr.rel (0) target = $region5
    $region4: #{tpu_custom_call.1} parent=1 // pred_region
      %19 = vsyncadd [#allocation3], 0
      %s21 = sshll.u32 %s0, 4
      %s22 = int_to_ptr.hbm [resolvable:$true] %s21
      %s23 = sshll.u32 [#allocation2], 4
      %s24 = int_to_ptr.vmem [resolvable:$true] %s23
      %26 = dma.hbm_to_vmem [thread:$0]  %s22, 64, %s24, [#allocation3]
    $region5: #{tpu_custom_call.1} parent=1 // pred_fallthru
      _
    // Predicated region
    $region6: #{tpu_custom_call.1} parent=1 // pred_check
      _
    $region7: #{tpu_custom_call.1} parent=1 // pred_check_branch
      %28 = sbr.rel (0) target = $region9
    $region8: #{tpu_custom_call.1} parent=1 // pred_region
      %30 = vsyncadd [#allocation6], 0
      %s31 = sshll.u32 %s1, 4
      %s32 = int_to_ptr.hbm [resolvable:$true] %s31
      %s33 = sshll.u32 [#allocation5], 4
      %s34 = int_to_ptr.vmem [resolvable:$true] %s33
      %39 = dma.hbm_to_vmem [thread:$0]  %s32, 1024, %s34, [#allocation6], 64, 64, 4
    $region9: #{tpu_custom_call.1} parent=1 // pred_fallthru
      _
    // Predicated region
    $region10: #{tpu_custom_call.1} parent=1 // pred_check
      _
    $region11: #{tpu_custom_call.1} parent=1 // pred_check_branch
      %41 = sbr.rel (0) target = $region13
    $region12: #{tpu_custom_call.1} parent=1 // pred_region
      _
    $region13: #{tpu_custom_call.1} parent=1 // pred_fallthru
      _
    // Predicated region
    $region14: #{tpu_custom_call.1} parent=1 // pred_check
      _
    $region15: #{tpu_custom_call.1} parent=1 // pred_check_branch
      %43 = sbr.rel (0) target = $region17
    $region16: #{tpu_custom_call.1} parent=1 // pred_region
      %45 = vsyncadd [#allocation6], 0
      %s46 = sshll.u32 %s3, 4
      %s47 = int_to_ptr.hbm [resolvable:$true] %s46
      %s48 = sshll.u32 [#allocation7], 4
      %s49 = int_to_ptr.vmem [resolvable:$true] %s48
      %54 = dma.hbm_to_vmem [thread:$0]  %s47, 1024, %s49, [#allocation6], 64, 64, 4
    $region17: #{tpu_custom_call.1} parent=1 // pred_fallthru
      _
    // Predicated region
    $region18: #{tpu_custom_call.1} parent=1 // pred_check
      _
    $region19: #{tpu_custom_call.1} parent=1 // pred_check_branch
      %56 = sbr.rel (0) target = $region21
    $region20: #{tpu_custom_call.1} parent=1 // pred_region
      %58 = vsyncadd [#allocation9], 0
      %s60 = sshll.u32 %s4, 4
      %s61 = int_to_ptr.hbm [resolvable:$true] %s60
      %s62 = sshll.u32 [#allocation8], 4
      %s63 = int_to_ptr.vmem [resolvable:$true] %s62
      %65 = dma.hbm_to_vmem [thread:$0]  %s61, 16, %s63, [#allocation9]
    $region21: #{tpu_custom_call.1} parent=1 // pred_fallthru
      _
    // Predicated region
    $region22: #{tpu_custom_call.1} parent=1 // pred_check
      _
    $region23: #{tpu_custom_call.1} parent=1 // pred_check_branch
      %67 = sbr.rel (0) target = $region25
    $region24: #{tpu_custom_call.1} parent=1 // pred_region
      %69 = vsyncadd [#allocation9], 0
      %s70 = sshll.u32 %s5, 4
      %s71 = int_to_ptr.hbm [resolvable:$true] %s70
      %s72 = sshll.u32 [#allocation10], 4
      %s73 = int_to_ptr.vmem [resolvable:$true] %s72
      %78 = dma.hbm_to_vmem [thread:$0]  %s71, 2048, %s73, [#allocation9], 128, 128, 8
    $region25: #{tpu_custom_call.1} parent=1 // pred_fallthru
      _
    // Predicated region
    $region26: #{tpu_custom_call.1} parent=1 // pred_check
      _
    $region27: #{tpu_custom_call.1} parent=1 // pred_check_branch
      %80 = sbr.rel (0) target = $region29
    $region28: #{tpu_custom_call.1} parent=1 // pred_region
      _
    $region29: #{tpu_custom_call.1} parent=1 // pred_fallthru
      _
    // Predicated region
    $region30: #{tpu_custom_call.1} parent=1 // pred_check
      _
    $region31: #{tpu_custom_call.1} parent=1 // pred_check_branch
      %82 = sbr.rel (0) target = $region33
    $region32: #{tpu_custom_call.1} parent=1 // pred_region
      %84 = dma.done [#allocation3], 64
    $region33: #{tpu_custom_call.1} parent=1 // pred_fallthru
      _
    // Predicated region
    $region34: #{tpu_custom_call.1} parent=1 // pred_check
      _
    $region35: #{tpu_custom_call.1} parent=1 // pred_check_branch
      %86 = sbr.rel (0) target = $region37
    $region36: #{tpu_custom_call.1} parent=1 // pred_region
      %88 = dma.done [#allocation6], 1024
    $region37: #{tpu_custom_call.1} parent=1 // pred_fallthru
      _
    // Predicated region
    $region38: #{tpu_custom_call.1} parent=1 // pred_check
      _
    $region39: #{tpu_custom_call.1} parent=1 // pred_check_branch
      %90 = sbr.rel (0) target = $region41
    $region40: #{tpu_custom_call.1} parent=1 // pred_region
      %92 = dma.done [#allocation6], 1024
    $region41: #{tpu_custom_call.1} parent=1 // pred_fallthru
      _
    // Predicated region
    $region42: #{tpu_custom_call.1} parent=1 // pred_check
      _
    $region43: #{tpu_custom_call.1} parent=1 // pred_check_branch
      %94 = sbr.rel (0) target = $region45
    $region44: #{tpu_custom_call.1} parent=1 // pred_region
      %96 = dma.done [#allocation9], 16
    $region45: #{tpu_custom_call.1} parent=1 // pred_fallthru
      _
    // Predicated region
    $region46: #{tpu_custom_call.1} parent=1 // pred_check
      _
    $region47: #{tpu_custom_call.1} parent=1 // pred_check_branch
      %98 = sbr.rel (0) target = $region49
    $region48: #{tpu_custom_call.1} parent=1 // pred_region
      %100 = dma.done [#allocation9], 2048
    $region49: #{tpu_custom_call.1} parent=1 // pred_fallthru
      _
    %v101 = vld [vmem:[#allocation2] sm:$0xf]
    %v102 = vld [vmem:[#allocation5] sm:$0xf]
    %v103 = vld [vmem:[#allocation5 + $0x4] sm:$0xf]
    %v104 = vld [vmem:[#allocation5 + $0x8] sm:$0xf]
    %v105 = vld [vmem:[#allocation5 + $0xc] sm:$0xf]
    %v106 = vld [vmem:[#allocation5 + $0x10] sm:$0xf]
    %v107 = vld [vmem:[#allocation5 + $0x14] sm:$0xf]
    %v108 = vld [vmem:[#allocation5 + $0x18] sm:$0xf]
    %v109 = vld [vmem:[#allocation5 + $0x1c] sm:$0xf]
    %v110 = vld [vmem:[#allocation5 + $0x20] sm:$0xf]
    %v111 = vld [vmem:[#allocation5 + $0x24] sm:$0xf]
    %v112 = vld [vmem:[#allocation5 + $0x28] sm:$0xf]
    %v113 = vld [vmem:[#allocation5 + $0x2c] sm:$0xf]
    %v114 = vld [vmem:[#allocation5 + $0x30] sm:$0xf]
    %v115 = vld [vmem:[#allocation5 + $0x34] sm:$0xf]
    %v116 = vld [vmem:[#allocation5 + $0x38] sm:$0xf]
    %v117 = vld [vmem:[#allocation5 + $0x3c] sm:$0xf]
    %v118 = vld [vmem:[%s2] sm:$0x1]
    %v120 = vperm.slane %v118, 0
    %v138 = vunpack.c.l.b16 %v102
    %v139 = vunpack.c.l.b16 %v103
    %v140 = vunpack.c.l.b16 %v104
    %v141 = vunpack.c.l.b16 %v105
    %v142 = vunpack.c.l.b16 %v106
    %v143 = vunpack.c.l.b16 %v107
    %v144 = vunpack.c.l.b16 %v108
    %v145 = vunpack.c.l.b16 %v109
    %v146 = vunpack.c.l.b16 %v110
    %v147 = vunpack.c.l.b16 %v111
    %v148 = vunpack.c.l.b16 %v112
    %v149 = vunpack.c.l.b16 %v113
    %v150 = vunpack.c.l.b16 %v114
    %v151 = vunpack.c.l.b16 %v115
    %v152 = vunpack.c.l.b16 %v116
    %v153 = vunpack.c.l.b16 %v117
    %v154 = vpack.c.b16 %v139, %v138
    %v155 = vpack.c.b16 %v141, %v140
    %v156 = vpack.c.b16 %v143, %v142
    %v157 = vpack.c.b16 %v145, %v144
    %v158 = vpack.c.b16 %v147, %v146
    %v159 = vpack.c.b16 %v149, %v148
    %v160 = vpack.c.b16 %v151, %v150
    %v161 = vpack.c.b16 %v153, %v152
    %170 = vmatpush.bf16.msra.mxu0 %v161
    %171 = vmatpush.bf16.msra.mxu0 %v160
    %172 = vmatpush.bf16.msra.mxu0 %v159
    %173 = vmatpush.bf16.msra.mxu0 %v158
    %174 = vmatpush.bf16.msra.mxu0 %v157
    %175 = vmatpush.bf16.msra.mxu0 %v156
    %176 = vmatpush.bf16.msra.mxu0 %v155
    %177 = vmatpush.bf16.msra.mxu0 %v154
    %178 = vmatmul.bf16.gmra.mxu0 %v101
    %v179 = vpop.f32.mrf.mxu0
    %v180 = vadd.f32 %v120, %v179
    %v181 = vpop.f32.mrf.mxu0
    %182 = vdwg.mxu0
    %v183 = vmul.f32 %v180, 0.01
    %v184 = vmax.f32 %v180, %v183
    %v185 = vpack.c.bf16 %v184, %v184
    %v186 = vld [vmem:[#allocation7] sm:$0xf]
    %v187 = vld [vmem:[#allocation7 + $0x4] sm:$0xf]
    %v188 = vld [vmem:[#allocation7 + $0x8] sm:$0xf]
    %v189 = vld [vmem:[#allocation7 + $0xc] sm:$0xf]
    %v190 = vld [vmem:[#allocation7 + $0x10] sm:$0xf]
    %v191 = vld [vmem:[#allocation7 + $0x14] sm:$0xf]
    %v192 = vld [vmem:[#allocation7 + $0x18] sm:$0xf]
    %v193 = vld [vmem:[#allocation7 + $0x1c] sm:$0xf]
    %v194 = vld [vmem:[#allocation7 + $0x20] sm:$0xf]
    %v195 = vld [vmem:[#allocation7 + $0x24] sm:$0xf]
    %v196 = vld [vmem:[#allocation7 + $0x28] sm:$0xf]
    %v197 = vld [vmem:[#allocation7 + $0x2c] sm:$0xf]
    %v198 = vld [vmem:[#allocation7 + $0x30] sm:$0xf]
    %v199 = vld [vmem:[#allocation7 + $0x34] sm:$0xf]
    %v200 = vld [vmem:[#allocation7 + $0x38] sm:$0xf]
    %v201 = vld [vmem:[#allocation7 + $0x3c] sm:$0xf]
    %v202 = vld [vmem:[#allocation8] sm:$0x1]
    %v204 = vperm.slane %v202, 0
    %v222 = vunpack.c.l.b16 %v186
    %v223 = vunpack.c.l.b16 %v187
    %v224 = vunpack.c.l.b16 %v188
    %v225 = vunpack.c.l.b16 %v189
    %v226 = vunpack.c.l.b16 %v190
    %v227 = vunpack.c.l.b16 %v191
    %v228 = vunpack.c.l.b16 %v192
    %v229 = vunpack.c.l.b16 %v193
    %v230 = vunpack.c.l.b16 %v194
    %v231 = vunpack.c.l.b16 %v195
    %v232 = vunpack.c.l.b16 %v196
    %v233 = vunpack.c.l.b16 %v197
    %v234 = vunpack.c.l.b16 %v198
    %v235 = vunpack.c.l.b16 %v199
    %v236 = vunpack.c.l.b16 %v200
    %v237 = vunpack.c.l.b16 %v201
    %v238 = vpack.c.b16 %v223, %v222
    %v239 = vpack.c.b16 %v225, %v224
    %v240 = vpack.c.b16 %v227, %v226
    %v241 = vpack.c.b16 %v229, %v228
    %v242 = vpack.c.b16 %v231, %v230
    %v243 = vpack.c.b16 %v233, %v232
    %v244 = vpack.c.b16 %v235, %v234
    %v245 = vpack.c.b16 %v237, %v236
    %254 = vmatpush.bf16.msra.mxu0 %v245
    %255 = vmatpush.bf16.msra.mxu0 %v244
    %256 = vmatpush.bf16.msra.mxu0 %v243
    %257 = vmatpush.bf16.msra.mxu0 %v242
    %258 = vmatpush.bf16.msra.mxu0 %v241
    %259 = vmatpush.bf16.msra.mxu0 %v240
    %260 = vmatpush.bf16.msra.mxu0 %v239
    %261 = vmatpush.bf16.msra.mxu0 %v238
    %262 = vmatmul.bf16.gmra.mxu0 %v185
    %v263 = vpop.f32.mrf.mxu0
    %v264 = vadd.f32 %v204, %v263
    %v265 = vpop.f32.mrf.mxu0
    %266 = vdwg.mxu0
    %v267 = vmul.f32 %v264, 0.01
    %v268 = vmax.f32 %v264, %v267
    %v269 = vpack.c.bf16 %v268, %v268
    %v270 = vld [vmem:[#allocation10] sm:$0xff]
    %v271 = vld [vmem:[#allocation10 + $0x8] sm:$0xff]
    %v272 = vld [vmem:[#allocation10 + $0x10] sm:$0xff]
    %v273 = vld [vmem:[#allocation10 + $0x18] sm:$0xff]
    %v274 = vld [vmem:[#allocation10 + $0x20] sm:$0xff]
    %v275 = vld [vmem:[#allocation10 + $0x28] sm:$0xff]
    %v276 = vld [vmem:[#allocation10 + $0x30] sm:$0xff]
    %v277 = vld [vmem:[#allocation10 + $0x38] sm:$0xff]
    %v278 = vld [vmem:[#allocation10 + $0x40] sm:$0xff]
    %v279 = vld [vmem:[#allocation10 + $0x48] sm:$0xff]
    %v280 = vld [vmem:[#allocation10 + $0x50] sm:$0xff]
    %v281 = vld [vmem:[#allocation10 + $0x58] sm:$0xff]
    %v282 = vld [vmem:[#allocation10 + $0x60] sm:$0xff]
    %v283 = vld [vmem:[#allocation10 + $0x68] sm:$0xff]
    %v284 = vld [vmem:[#allocation10 + $0x70] sm:$0xff]
    %v285 = vld [vmem:[#allocation10 + $0x78] sm:$0xff]
    %v286 = vld [vmem:[%s6] sm:$0x3]
    %v288 = vperm.slane %v286, 0
    %v289 = vperm.slane %v286, 1
    %v308 = vunpack.c.l.b16 %v270
    %v309 = vunpack.c.h.b16 %v270
    %v310 = vunpack.c.l.b16 %v271
    %v311 = vunpack.c.h.b16 %v271
    %v312 = vunpack.c.l.b16 %v272
    %v313 = vunpack.c.h.b16 %v272
    %v314 = vunpack.c.l.b16 %v273
    %v315 = vunpack.c.h.b16 %v273
    %v316 = vunpack.c.l.b16 %v274
    %v317 = vunpack.c.h.b16 %v274
    %v318 = vunpack.c.l.b16 %v275
    %v319 = vunpack.c.h.b16 %v275
    %v320 = vunpack.c.l.b16 %v276
    %v321 = vunpack.c.h.b16 %v276
    %v322 = vunpack.c.l.b16 %v277
    %v323 = vunpack.c.h.b16 %v277
    %v324 = vunpack.c.l.b16 %v278
    %v325 = vunpack.c.h.b16 %v278
    %v326 = vunpack.c.l.b16 %v279
    %v327 = vunpack.c.h.b16 %v279
    %v328 = vunpack.c.l.b16 %v280
    %v329 = vunpack.c.h.b16 %v280
    %v330 = vunpack.c.l.b16 %v281
    %v331 = vunpack.c.h.b16 %v281
    %v332 = vunpack.c.l.b16 %v282
    %v333 = vunpack.c.h.b16 %v282
    %v334 = vunpack.c.l.b16 %v283
    %v335 = vunpack.c.h.b16 %v283
    %v336 = vunpack.c.l.b16 %v284
    %v337 = vunpack.c.h.b16 %v284
    %v338 = vunpack.c.l.b16 %v285
    %v339 = vunpack.c.h.b16 %v285
    %v340 = vpack.c.b16 %v310, %v308
    %v341 = vpack.c.b16 %v311, %v309
    %v342 = vpack.c.b16 %v314, %v312
    %v343 = vpack.c.b16 %v315, %v313
    %v344 = vpack.c.b16 %v318, %v316
    %v345 = vpack.c.b16 %v319, %v317
    %v346 = vpack.c.b16 %v322, %v320
    %v347 = vpack.c.b16 %v323, %v321
    %v348 = vpack.c.b16 %v326, %v324
    %v349 = vpack.c.b16 %v327, %v325
    %v350 = vpack.c.b16 %v330, %v328
    %v351 = vpack.c.b16 %v331, %v329
    %v352 = vpack.c.b16 %v334, %v332
    %v353 = vpack.c.b16 %v335, %v333
    %v354 = vpack.c.b16 %v338, %v336
    %v355 = vpack.c.b16 %v339, %v337
    %372 = vmatpush.bf16.msra.mxu0 %v354
    %373 = vmatpush.bf16.msra.mxu0 %v352
    %374 = vmatpush.bf16.msra.mxu0 %v350
    %375 = vmatpush.bf16.msra.mxu0 %v348
    %376 = vmatpush.bf16.msra.mxu0 %v346
    %377 = vmatpush.bf16.msra.mxu0 %v344
    %378 = vmatpush.bf16.msra.mxu0 %v342
    %379 = vmatpush.bf16.msra.mxu0 %v340
    %380 = vmatmul.bf16.gmra.mxu0 %v269
    %v381 = vpop.f32.mrf.mxu0
    %v382 = vadd.f32 %v288, %v381
    %v383 = vpop.f32.mrf.mxu0
    %384 = vdwg.mxu0
    %385 = vmatpush.bf16.msra.mxu0 %v355
    %386 = vmatpush.bf16.msra.mxu0 %v353
    %387 = vmatpush.bf16.msra.mxu0 %v351
    %388 = vmatpush.bf16.msra.mxu0 %v349
    %389 = vmatpush.bf16.msra.mxu0 %v347
    %390 = vmatpush.bf16.msra.mxu0 %v345
    %391 = vmatpush.bf16.msra.mxu0 %v343
    %392 = vmatpush.bf16.msra.mxu0 %v341
    %393 = vmatmul.bf16.gmra.mxu0 %v269
    %v394 = vpop.f32.mrf.mxu0
    %v395 = vadd.f32 %v289, %v394
    %v396 = vpop.f32.mrf.mxu0
    %397 = vdwg.mxu0
    %v398 = vmul.f32 %v382, 0.01
    %v399 = vmul.f32 %v395, 0.01
    %v400 = vmax.f32 %v382, %v398
    %v401 = vmax.f32 %v395, %v399
    %402 = vst [vmem:[#allocation11] sm:$0xff] %v400
    %403 = vst [vmem:[#allocation11 + $0x8] sm:$0xff] %v401
    // Predicated region
    $region50: #{tpu_custom_call.1} parent=1 // pred_check
      _
    $region51: #{tpu_custom_call.1} parent=1 // pred_check_branch
      %405 = sbr.rel (0) target = $region53
    $region52: #{tpu_custom_call.1} parent=1 // pred_region
      %407 = vsyncadd [#allocation4], 0
      %s409 = sshll.u32 [#allocation11], 4
      %s410 = int_to_ptr.vmem [resolvable:$true] %s409
      %s411 = sshll.u32 %s7, 4
      %s412 = int_to_ptr.hbm [resolvable:$true] %s411
      %414 = dma.vmem_to_hbm [thread:$0]  %s410, 256, %s412, [#allocation4]
    $region53: #{tpu_custom_call.1} parent=1 // pred_fallthru
      _
    // Predicated region
    $region54: #{tpu_custom_call.1} parent=1 // pred_check
      _
    $region55: #{tpu_custom_call.1} parent=1 // pred_check_branch
      %416 = sbr.rel (0) target = $region57
    $region56: #{tpu_custom_call.1} parent=1 // pred_region
      %418 = dma.done [#allocation4], 256
    $region57: #{tpu_custom_call.1} parent=1 // pred_fallthru
      _
    %419 = vsyncpa [#allocation3], 1
    %420 = vsyncpa [#allocation6], 1
    %421 = vsyncpa [#allocation9], 1
    %422 = vsyncpa [#allocation4], 1

</llo_original>
